<compile_context>
chip_gen: v5e
topology: v5e:2x2
jax: 0.10.0
libtpu: 0.0.40
codegen_flags: <defaults>
</compile_context>

<pallas_src>
import functools

import jax
import jax.numpy as jnp
from jax.experimental import pallas as pl
from jax.experimental.pallas import tpu as pltpu

# ---------------------------------------------------------------------------
# Synthetic dataset / model dims (small, deterministic; no checkpoint load).
# ---------------------------------------------------------------------------
TEXTDIM = 32            # == hidden_size (LayerNorm dim must match TEXTDIM)
MOSIVISUALDIM = 20      # "visual" feature dim for the synthetic 'mosi' dataset
CMUSPEECHDIM = 12       # "speech" feature dim
PADDED_PAIRDIM = 32     # common zero-padded pair feature dim (one kernel shape)

LN_EPS = 1e-5


def joint_embeddings_kernel(x_ref, p_ref, w_ref, params_ref, o_ref):
    """Single grid step over the whole (tiny) problem.

    x_ref:      (R_t, D)   text rows  = input_embs reshaped to (B*S_t, D)
    p_ref:      (R_p, Vp)  pair rows, feature dim zero-padded to Vp = 32
    w_ref:      (Vp, D)    linear weight (transposed vs torch, rows zero-padded)
    params_ref: (3, D)     rows = [linear bias, LN gamma, LN beta]
    o_ref:      (R_t+R_p, D)  rows [0:R_t] = LN(text), rows [R_t:] = LN(relu(p@W+b))
    """
    params = params_ref[...]
    bias = params[0:1, :]
    gamma = params[1:2, :]
    beta = params[2:3, :]
    # NOTE: broadcasting via jnp ops; pl.ds(..., stride=0) sublane-broadcast
    # loads were skipped as a negligible micro-opt with extra lowering risk.

    # Linear + ReLU over the whole batch in ONE MXU matmul (f32 accumulate).
    # Zero-padded input lanes hit zero-padded weight rows -> exact match with
    # the unpadded 20/12-feature matmul.
    pe = jnp.dot(p_ref[...], w_ref[...], preferred_element_type=jnp.float32)
    pe = jnp.maximum(pe + bias, 0.0)                          # (R_p, D)

    # Stack text rows and pair rows along the sublane axis (tile-aligned for
    # the shapes used here) and LayerNorm ONCE over all rows.
    rows = jnp.concatenate([x_ref[...].astype(jnp.float32), pe], axis=0)
    mean = jnp.mean(rows, axis=-1, keepdims=True)
    centered = rows - mean
    var = jnp.mean(centered * centered, axis=-1, keepdims=True)
    ln = centered * jax.lax.rsqrt(var + LN_EPS) * gamma + beta

    # One sublane-contiguous 2-D slab store; the seq-axis interleave happens
    # in the JAX wrapper.
    o_ref[...] = ln.astype(o_ref.dtype)

    # Dropout: eval-mode identity.
    # TODO(synk): training-mode dropout (stateful PRNG mask) not implemented.


@functools.partial(jax.jit, static_argnames=("B", "S_t", "S_p"))
def _forward(x2d, p2d, w, params, *, B, S_t, S_p):
    """Runs the Pallas kernel and reassembles the (B, S_t+S_p, D) output.

    The pair feature dim is pre-padded to PADDED_PAIRDIM by the caller, so the
    visual and speech branches present identical shapes here -> one jit trace
    and one Mosaic compile for both.
    """
    R_t, D = x2d.shape
    R_p, Vp = p2d.shape
    R = R_t + R_p

    out2d = pl.pallas_call(
        joint_embeddings_kernel,
        out_shape=jax.ShapeDtypeStruct((R, D), jnp.float32),
        grid=(1,),
        in_specs=[
            pl.BlockSpec((R_t, D), lambda i: (0, 0)),
            pl.BlockSpec((R_p, Vp), lambda i: (0, 0)),
            pl.BlockSpec((Vp, D), lambda i: (0, 0)),
            pl.BlockSpec((3, D), lambda i: (0, 0)),
        ],
        out_specs=pl.BlockSpec((R, D), lambda i: (0, 0)),
        compiler_params=pltpu.CompilerParams(
            dimension_semantics=("arbitrary",)),
        # NOTE(v7x): a 'parallel' row-tile grid axis (both TensorCores) and
        # vmem_limit tuning only pay once B*S grows ~3 orders of magnitude;
        # at this size each extra grid step costs more than the compute.
    )(x2d, p2d, w, params)

    # Wrapper-side reshape + seq-axis concat (~4 KB, noise on any generation).
    ln_x = out2d[:R_t].reshape(B, S_t, D)
    ln_p = out2d[R_t:].reshape(B, S_p, D)
    return jnp.concatenate([ln_x, ln_p], axis=1)


class JointEmbeddingsPallas:
    """JAX/Pallas port of the PyTorch JointEmbeddings module (eval mode)."""

    def __init__(self, hidden_size, dropout_prob, dataset, key):
        assert hidden_size == TEXTDIM, "LayerNorm dim must equal TEXTDIM"
        if dataset == "mosi":
            self.VISUALDIM = MOSIVISUALDIM
            self.SPEECHDIM = CMUSPEECHDIM
        else:
            raise ValueError("only the synthetic 'mosi' config is wired up")
        assert max(self.VISUALDIM, self.SPEECHDIM) <= PADDED_PAIRDIM

        ks = jax.random.split(key, 2)
        D = TEXTDIM

        def linear_params(k, in_f, out_f):
            kw, kb = jax.random.split(k)
            bound = 1.0 / jnp.sqrt(in_f)
            w = jax.random.uniform(kw, (in_f, out_f), jnp.float32, -bound, bound)
            b = jax.random.uniform(kb, (1, out_f), jnp.float32, -bound, bound)
            return w, b

        # Parameters the forward actually uses.
        # (W_cv / W_cs exist in the torch __init__ but are unused by forward.)
        self.Wv_w, self.Wv_b = linear_params(ks[0], self.VISUALDIM, D)
        self.Ws_w, self.Ws_b = linear_params(ks[1], self.SPEECHDIM, D)
        self.ln_gamma = jnp.ones((1, D), jnp.float32)
        self.ln_beta = jnp.zeros((1, D), jnp.float32)
        self.dropout_prob = dropout_prob  # eval-mode identity

        # Zero-pad the weight's input dim to the common PADDED_PAIRDIM so both
        # branches share one kernel / block shape (single jit + Mosaic compile).
        def pad_rows(w):
            return jnp.pad(w, ((0, PADDED_PAIRDIM - w.shape[0]), (0, 0)))

        self.Wv_w_pad = pad_rows(self.Wv_w)
        self.Ws_w_pad = pad_rows(self.Ws_w)

        # Merged per-branch (bias, gamma, beta) operand: one DMA instead of 3.
        self.params_v = jnp.concatenate(
            [self.Wv_b, self.ln_gamma, self.ln_beta], axis=0)
        self.params_s = jnp.concatenate(
            [self.Ws_b, self.ln_gamma, self.ln_beta], axis=0)

    def __call__(self, input_embs, pair_ids):
        last = pair_ids.shape[-1]
        if last == self.VISUALDIM:
            w, params = self.Wv_w_pad, self.params_v
        elif last == self.SPEECHDIM:
            w, params = self.Ws_w_pad, self.params_s
        else:
            raise Exception("Wrong")

        B, S_t, D = input_embs.shape
        _, S_p, _ = pair_ids.shape

        # Tiny eager prep OUTSIDE the jitted kernel path so both branches
        # present identical shapes to _forward (one compile total).
        x2d = jnp.asarray(input_embs, jnp.float32).reshape(B * S_t, D)
        p2d = jnp.asarray(pair_ids, jnp.float32).reshape(B * S_p, last)
        p2d = jnp.pad(p2d, ((0, 0), (0, PADDED_PAIRDIM - last)))

        return _forward(x2d, p2d, w, params, B=B, S_t=S_t, S_p=S_p)


def _reference(input_embs, pair_ids, w, b, gamma, beta):
    pe = jax.nn.relu(pair_ids @ w + b)
    cat = jnp.concatenate([input_embs, pe], axis=1)
    mean = jnp.mean(cat, axis=-1, keepdims=True)
    var = jnp.mean((cat - mean) ** 2, axis=-1, keepdims=True)
    return (cat - mean) / jnp.sqrt(var + LN_EPS) * gamma + beta


if __name__ == "__main__":
    key = jax.random.PRNGKey(0)
    k_mod, k_x, k_pv, k_ps = jax.random.split(key, 4)

    B, S_t, S_p = 2, 8, 8
    hidden = TEXTDIM  # 32

    mod = JointEmbeddingsPallas(hidden, dropout_prob=0.1, dataset="mosi", key=k_mod)

    input_embs = jax.random.normal(k_x, (B, S_t, hidden), jnp.float32)
    pair_ids_visual = jax.random.normal(k_pv, (B, S_p, MOSIVISUALDIM), jnp.float32)
    pair_ids_speech = jax.random.normal(k_ps, (B, S_p, CMUSPEECHDIM), jnp.float32)

    # Visual branch
    out_v = mod(input_embs, pair_ids_visual)
    jax.block_until_ready(out_v)
    ref_v = _reference(input_embs, pair_ids_visual, mod.Wv_w, mod.Wv_b,
                       mod.ln_gamma, mod.ln_beta)
    assert out_v.shape == (B, S_t + S_p, hidden)
    assert jnp.allclose(out_v, ref_v, atol=1e-5, rtol=1e-5)

    # Speech branch — same padded shapes, hits the already-compiled kernel.
    out_s = mod(input_embs, pair_ids_speech)
    jax.block_until_ready(out_s)
    ref_s = _reference(input_embs, pair_ids_speech, mod.Ws_w, mod.Ws_b,
                       mod.ln_gamma, mod.ln_beta)
    assert out_s.shape == (B, S_t + S_p, hidden)
    assert jnp.allclose(out_s, ref_s, atol=1e-5, rtol=1e-5)

    print("KERNEL_OK")
</pallas_src>

<mosaic_0001>
module attributes {stable_mosaic.version = 11 : i64} {
  func.func @joint_embeddings_kernel(%arg0: i32, %arg1: memref<16x32xf32, #tpu.memory_space<vmem>>, %arg2: memref<16x32xf32, #tpu.memory_space<vmem>>, %arg3: memref<32x32xf32, #tpu.memory_space<vmem>>, %arg4: memref<3x32xf32, #tpu.memory_space<vmem>>, %arg5: memref<32x32xf32, #tpu.memory_space<vmem>>) attributes {dimension_semantics = [#tpu.dimension_semantics<arbitrary>], iteration_bounds = array<i64: 1>, scalar_prefetch = 0 : i64, scratch_operands = 0 : i64, tpu.core_type = #tpu.core_type<tc>, window_params = [{pipeline_mode = #tpu.pipeline_mode<synchronous>, transform_indices = @transform_0, window_bounds = array<i64: 16, 32>}, {pipeline_mode = #tpu.pipeline_mode<synchronous>, transform_indices = @transform_1, window_bounds = array<i64: 16, 32>}, {pipeline_mode = #tpu.pipeline_mode<synchronous>, transform_indices = @transform_2, window_bounds = array<i64: 32, 32>}, {pipeline_mode = #tpu.pipeline_mode<synchronous>, transform_indices = @transform_3, window_bounds = array<i64: 3, 32>}, {pipeline_mode = #tpu.pipeline_mode<synchronous>, transform_indices = @transform_4, window_bounds = array<i64: 32, 32>}]} {
    %c0 = arith.constant 0 : index
    %c0_0 = arith.constant 0 : index
    %0 = vector.load %arg4[%c0, %c0_0] : memref<3x32xf32, #tpu.memory_space<vmem>>, vector<3x32xf32>
    %1 = vector.extract_strided_slice %0 {offsets = [0, 0], sizes = [1, 32], strides = [1, 1]} : vector<3x32xf32> to vector<1x32xf32>
    %2 = vector.extract_strided_slice %0 {offsets = [1, 0], sizes = [1, 32], strides = [1, 1]} : vector<3x32xf32> to vector<1x32xf32>
    %3 = vector.extract_strided_slice %0 {offsets = [2, 0], sizes = [1, 32], strides = [1, 1]} : vector<3x32xf32> to vector<1x32xf32>
    %c0_1 = arith.constant 0 : index
    %c0_2 = arith.constant 0 : index
    %4 = vector.load %arg2[%c0_1, %c0_2] : memref<16x32xf32, #tpu.memory_space<vmem>>, vector<16x32xf32>
    %c0_3 = arith.constant 0 : index
    %c0_4 = arith.constant 0 : index
    %5 = vector.load %arg3[%c0_3, %c0_4] : memref<32x32xf32, #tpu.memory_space<vmem>>, vector<32x32xf32>
    %cst = arith.constant dense<0.000000e+00> : vector<16x32xf32>
    %6 = tpu.matmul %4, %5, %cst {dimension_numbers = #tpu.dot_dimension_numbers<[1], [0], [0], [1], [0, 0, 1, 1], [], []>} : vector<16x32xf32>, vector<32x32xf32>, vector<16x32xf32> -> vector<16x32xf32>
    %7 = vector.broadcast %1 : vector<1x32xf32> to vector<16x32xf32>
    %8 = arith.addf %6, %7 : vector<16x32xf32>
    %cst_5 = arith.constant 0.000000e+00 : f32
    %9 = vector.broadcast %cst_5 : f32 to vector<16x32xf32>
    %10 = arith.maximumf %8, %9 : vector<16x32xf32>
    %c0_6 = arith.constant 0 : index
    %c0_7 = arith.constant 0 : index
    %11 = vector.load %arg1[%c0_6, %c0_7] : memref<16x32xf32, #tpu.memory_space<vmem>>, vector<16x32xf32>
    %12 = tpu.concatenate %11, %10 in 0 : vector<16x32xf32>, vector<16x32xf32> -> vector<32x32xf32>
    %cst_8 = arith.constant dense<0.000000e+00> : vector<32xf32>
    %13 = vector.multi_reduction <add>, %12, %cst_8 [1] : vector<32x32xf32> to vector<32xf32>
    %14 = vector.shape_cast %13 : vector<32xf32> to vector<32x1xf32>
    %cst_9 = arith.constant 3.200000e+01 : f32
    %15 = vector.broadcast %cst_9 : f32 to vector<32x1xf32>
    %16 = arith.divf %14, %15 : vector<32x1xf32>
    %17 = vector.broadcast %16 : vector<32x1xf32> to vector<32x32xf32>
    %18 = arith.subf %12, %17 : vector<32x32xf32>
    %19 = arith.mulf %18, %18 : vector<32x32xf32>
    %cst_10 = arith.constant dense<0.000000e+00> : vector<32xf32>
    %20 = vector.multi_reduction <add>, %19, %cst_10 [1] : vector<32x32xf32> to vector<32xf32>
    %21 = vector.shape_cast %20 : vector<32xf32> to vector<32x1xf32>
    %cst_11 = arith.constant 3.200000e+01 : f32
    %22 = vector.broadcast %cst_11 : f32 to vector<32x1xf32>
    %23 = arith.divf %21, %22 : vector<32x1xf32>
    %cst_12 = arith.constant 9.99999974E-6 : f32
    %24 = vector.broadcast %cst_12 : f32 to vector<32x1xf32>
    %25 = arith.addf %23, %24 : vector<32x1xf32>
    %26 = math.rsqrt %25 : vector<32x1xf32>
    %27 = vector.broadcast %26 : vector<32x1xf32> to vector<32x32xf32>
    %28 = arith.mulf %18, %27 : vector<32x32xf32>
    %29 = vector.broadcast %2 : vector<1x32xf32> to vector<32x32xf32>
    %30 = arith.mulf %28, %29 : vector<32x32xf32>
    %31 = vector.broadcast %3 : vector<1x32xf32> to vector<32x32xf32>
    %32 = arith.addf %30, %31 : vector<32x32xf32>
    %c0_13 = arith.constant 0 : index
    %c0_14 = arith.constant 0 : index
    %33 = vector.load %arg5[%c0_13, %c0_14] : memref<32x32xf32, #tpu.memory_space<vmem>>, vector<32x32xf32>
    tpu.vector_store %arg5[%c0_13, %c0_14], %32 {strides = array<i32>} : memref<32x32xf32, #tpu.memory_space<vmem>>, vector<32x32xf32>,
    return
  }
  func.func @transform_0(%arg0: i32) -> (i32, i32) {
    %c0_i32 = arith.constant 0 : i32
    %c0_i32_0 = arith.constant 0 : i32
    %c0_i32_1 = arith.constant 0 : i32
    return %c0_i32, %c0_i32_0 : i32, i32
  }
  func.func @transform_1(%arg0: i32) -> (i32, i32) {
    %c0_i32 = arith.constant 0 : i32
    %c0_i32_0 = arith.constant 0 : i32
    %c0_i32_1 = arith.constant 0 : i32
    return %c0_i32, %c0_i32_0 : i32, i32
  }
  func.func @transform_2(%arg0: i32) -> (i32, i32) {
    %c0_i32 = arith.constant 0 : i32
    %c0_i32_0 = arith.constant 0 : i32
    %c0_i32_1 = arith.constant 0 : i32
    return %c0_i32, %c0_i32_0 : i32, i32
  }
  func.func @transform_3(%arg0: i32) -> (i32, i32) {
    %c0_i32 = arith.constant 0 : i32
    %c0_i32_0 = arith.constant 0 : i32
    %c0_i32_1 = arith.constant 0 : i32
    return %c0_i32, %c0_i32_0 : i32, i32
  }
  func.func @transform_4(%arg0: i32) -> (i32, i32) {
    %c0_i32 = arith.constant 0 : i32
    %c0_i32_0 = arith.constant 0 : i32
    %c0_i32_1 = arith.constant 0 : i32
    return %c0_i32, %c0_i32_0 : i32, i32
  }
}

</mosaic_0001>

<llo_original>
// kernel: _forward.1
$region0: #{_forward.1}
  #allocation0 [shape = 'u32[]', space=smem, size = 0x4, offset = 0x4, fixed_abs, tag = 'smem constant byte address 0x4 - core index']
  #allocation1 [shape = 'u32[72,128]{1,0:T(1,128)}', space=vmem, size = 0x9000, scoped, tag = 'internal scratch']
  %s0 = inlined_call_operand.hbm [shape: f32[16,32], index: 0, kind: input, shape index: {}]
  %s1 = inlined_call_operand.hbm [shape: f32[16,32], index: 1, kind: input, shape index: {}]
  %s2 = inlined_call_operand.hbm [shape: f32[32,32], index: 2, kind: input, shape index: {}]
  %s3 = inlined_call_operand.hbm [shape: f32[3,32], index: 3, kind: input, shape index: {}]
  %s4 = inlined_call_operand.vmem [shape: f32[32,32], index: 4, kind: output, shape index: {}]
  %s5 = sld [smem:[#allocation0]]
  $region42: #{_forward.1} parent=0
    _
  %s7 = ssub.s32 1, %s5
  %s8 = scalar_select 0, %s7, %s5
  $region1: #{_forward.1} parent=0
    #allocation2 [shape = 'u8[8192]{0}', space=vmem, size = 0x2000, scoped, tag = 'input window, operand 0, single buffered']
    #allocation3 [shape = 's32[1]{0}', space=sflag, size = 0x4, scoped, tag = 'scoped memory for _forward.1']
    #allocation4 [shape = 'u8[8192]{0}', space=vmem, size = 0x2000, scoped, tag = 'input window, operand 1, single buffered']
    #allocation5 [shape = 's32[1]{0}', space=sflag, size = 0x4, scoped, tag = 'scoped memory for _forward.1']
    #allocation6 [shape = 'u8[16384]{0}', space=vmem, size = 0x4000, scoped, tag = 'input window, operand 2, single buffered']
    #allocation7 [shape = 'u8[2048]{0}', space=vmem, size = 0x800, scoped, tag = 'input window, operand 3, single buffered']
    #allocation8 [shape = 's32[1]{0}', space=sflag, size = 0x4, scoped, tag = 'scoped memory for _forward.1']
    %9 = vsyncpa [#allocation3], 0
    %10 = vsyncpa [#allocation5], 0
    %11 = vsyncpa [#allocation8], 0
    // Predicated region
    $region2: #{_forward.1} parent=1 // pred_check
      _
    $region3: #{_forward.1} parent=1 // pred_check_branch
      %13 = sbr.rel (0) target = $region5
    $region4: #{_forward.1} parent=1 // pred_region
      %15 = vsyncadd [#allocation3], 0
      %s16 = sshll.u32 %s0, 4
      %s17 = int_to_ptr.hbm [resolvable:$true] %s16
      %s18 = sshll.u32 [#allocation2], 4
      %s19 = int_to_ptr.vmem [resolvable:$true] %s18
      %24 = dma.hbm_to_vmem [thread:$0]  %s17, 256, %s19, [#allocation3], 128, 128, 8
    $region5: #{_forward.1} parent=1 // pred_fallthru
      _
    // Predicated region
    $region6: #{_forward.1} parent=1 // pred_check
      _
    $region7: #{_forward.1} parent=1 // pred_check_branch
      %26 = sbr.rel (0) target = $region9
    $region8: #{_forward.1} parent=1 // pred_region
      %28 = vsyncadd [#allocation5], 0
      %s29 = sshll.u32 %s1, 4
      %s30 = int_to_ptr.hbm [resolvable:$true] %s29
      %s31 = sshll.u32 [#allocation4], 4
      %s32 = int_to_ptr.vmem [resolvable:$true] %s31
      %37 = dma.hbm_to_vmem [thread:$0]  %s30, 256, %s32, [#allocation5], 128, 128, 8
    $region9: #{_forward.1} parent=1 // pred_fallthru
      _
    // Predicated region
    $region10: #{_forward.1} parent=1 // pred_check
      _
    $region11: #{_forward.1} parent=1 // pred_check_branch
      %39 = sbr.rel (0) target = $region13
    $region12: #{_forward.1} parent=1 // pred_region
      %41 = vsyncadd [#allocation5], 0
      %s42 = sshll.u32 %s2, 4
      %s43 = int_to_ptr.hbm [resolvable:$true] %s42
      %s44 = sshll.u32 [#allocation6], 4
      %s45 = int_to_ptr.vmem [resolvable:$true] %s44
      %50 = dma.hbm_to_vmem [thread:$0]  %s43, 512, %s45, [#allocation5], 128, 128, 8
    $region13: #{_forward.1} parent=1 // pred_fallthru
      _
    // Predicated region
    $region14: #{_forward.1} parent=1 // pred_check
      _
    $region15: #{_forward.1} parent=1 // pred_check_branch
      %52 = sbr.rel (0) target = $region17
    $region16: #{_forward.1} parent=1 // pred_region
      %54 = vsyncadd [#allocation8], 0
      %s56 = sshll.u32 %s3, 4
      %s57 = int_to_ptr.hbm [resolvable:$true] %s56
      %s58 = sshll.u32 [#allocation7], 4
      %s59 = int_to_ptr.vmem [resolvable:$true] %s58
      %61 = dma.hbm_to_vmem [thread:$0]  %s57, 64, %s59, [#allocation8]
    $region17: #{_forward.1} parent=1 // pred_fallthru
      _
    // Predicated region
    $region18: #{_forward.1} parent=1 // pred_check
      _
    $region19: #{_forward.1} parent=1 // pred_check_branch
      %63 = sbr.rel (0) target = $region21
    $region20: #{_forward.1} parent=1 // pred_region
      %65 = dma.done [#allocation3], 256
    $region21: #{_forward.1} parent=1 // pred_fallthru
      _
    // Predicated region
    $region22: #{_forward.1} parent=1 // pred_check
      _
    $region23: #{_forward.1} parent=1 // pred_check_branch
      %67 = sbr.rel (0) target = $region25
    $region24: #{_forward.1} parent=1 // pred_region
      %69 = dma.done [#allocation5], 256
    $region25: #{_forward.1} parent=1 // pred_fallthru
      _
    // Predicated region
    $region26: #{_forward.1} parent=1 // pred_check
      _
    $region27: #{_forward.1} parent=1 // pred_check_branch
      %71 = sbr.rel (0) target = $region29
    $region28: #{_forward.1} parent=1 // pred_region
      %73 = dma.done [#allocation5], 512
    $region29: #{_forward.1} parent=1 // pred_fallthru
      _
    // Predicated region
    $region30: #{_forward.1} parent=1 // pred_check
      _
    $region31: #{_forward.1} parent=1 // pred_check_branch
      %75 = sbr.rel (0) target = $region33
    $region32: #{_forward.1} parent=1 // pred_region
      %77 = dma.done [#allocation8], 64
    $region33: #{_forward.1} parent=1 // pred_fallthru
      _
    %v78 = vld [vmem:[#allocation7] sm:$0x7]
    %v79 = vld [vmem:[#allocation4] sm:$0xff]
    %v80 = vld [vmem:[#allocation4 + $0x8] sm:$0xff]
    %v81 = vld [vmem:[#allocation6] sm:$0xff]
    %v82 = vld [vmem:[#allocation6 + $0x8] sm:$0xff]
    %v83 = vld [vmem:[#allocation6 + $0x10] sm:$0xff]
    %v84 = vld [vmem:[#allocation6 + $0x18] sm:$0xff]
    %v85 = vperm.slane %v78, 0
    %vm86 = vcmask 261120
    %v88 = vsel %vm86, %v79, 0
    %v91 = vsel %vm86, %v80, 0
    %93 = vmatpush.msra.mxu0 0.0
    %94 = vmatpush.msra.mxu0 0.0
    %95 = vmatpush.msra.mxu0 0.0
    %96 = vmatpush.msra.mxu0 0.0
    %97 = vmatpush.msra.mxu0 0.0
    %98 = vmatpush.msra.mxu0 0.0
    %99 = vmatpush.msra.mxu0 0.0
    %100 = vmatpush.msra.mxu0 0.0
    %101 = vmatpush.msra.mxu0 0.0
    %102 = vmatpush.msra.mxu0 0.0
    %103 = vmatpush.msra.mxu0 0.0
    %104 = vmatpush.msra.mxu0 0.0
    %105 = vmatpush.msra.mxu0 %v84
    %106 = vmatpush.msra.mxu0 %v83
    %107 = vmatpush.msra.mxu0 %v82
    %108 = vmatpush.msra.mxu0 %v81
    %109 = vmatmul.f32.gmra.mxu0 %v88
    %v110 = vpop.f32.mrf.mxu0
    %v111 = vadd.f32 %v85, %v110
    %112 = vmatmul.f32.gmra.mxu0 %v91
    %v113 = vpop.f32.mrf.mxu0
    %v114 = vadd.f32 %v85, %v113
    %115 = vdwg.mxu0
    %v116 = vmax.f32 %v111, 0.0
    %v117 = vmax.f32 %v114, 0.0
    %v118 = vld [vmem:[#allocation2] sm:$0xff]
    %v119 = vld [vmem:[#allocation2 + $0x8] sm:$0xff]
    %v120 = vsel %vm86, %v118, 0.0
    %121 = vadd.xlane.f32.xlu0 %v120
    %v122 = vpop.xlane.xlu0 %121
    %v123 = vsel %vm86, %v119, 0.0
    %124 = vadd.xlane.f32.xlu0 %v123
    %v125 = vpop.xlane.xlu0 %124
    %v126 = vsel %vm86, %v116, 0.0
    %127 = vadd.xlane.f32.xlu0 %v126
    %v128 = vpop.xlane.xlu0 %127
    %v129 = vsel %vm86, %v117, 0.0
    %130 = vadd.xlane.f32.xlu0 %v129
    %v131 = vpop.xlane.xlu0 %130
    %v132 = vrcp.pop 32.0
    %v133 = vmul.f32 32.0, %v132
    %v134 = vsub.f32 1.0, %v133
    %v135 = vmul.f32 %v132, %v134
    %v136 = vadd.f32 %v132, %v135
    %vm137 = vweird.f32 %v132
    %v138 = vsel %vm137, %v132, %v136
    %v139 = vmul.f32 %v122, %v138
    %v140 = vmul.f32 %v125, %v138
    %v141 = vmul.f32 %v128, %v138
    %v142 = vmul.f32 %v131, %v138
    %v143 = vsub.f32 %v118, %v139
    %v144 = vsub.f32 %v119, %v140
    %v145 = vsub.f32 %v116, %v141
    %v146 = vsub.f32 %v117, %v142
    %v147 = vmul.f32 %v143, %v143
    %v148 = vmul.f32 %v144, %v144
    %v149 = vmul.f32 %v145, %v145
    %v150 = vmul.f32 %v146, %v146
    %v151 = vsel %vm86, %v147, 0.0
    %152 = vadd.xlane.f32.xlu0 %v151
    %v153 = vpop.xlane.xlu0 %152
    %v154 = vsel %vm86, %v148, 0.0
    %155 = vadd.xlane.f32.xlu0 %v154
    %v156 = vpop.xlane.xlu0 %155
    %v157 = vsel %vm86, %v149, 0.0
    %158 = vadd.xlane.f32.xlu0 %v157
    %v159 = vpop.xlane.xlu0 %158
    %v160 = vsel %vm86, %v150, 0.0
    %161 = vadd.xlane.f32.xlu0 %v160
    %v162 = vpop.xlane.xlu0 %161
    %v163 = vmul.f32 %v153, %v138
    %v164 = vmul.f32 %v156, %v138
    %v165 = vmul.f32 %v159, %v138
    %v166 = vmul.f32 %v162, %v138
    %v167 = vadd.f32 %v163, 1e-05
    %v168 = vadd.f32 %v164, 1e-05
    %v169 = vadd.f32 %v165, 1e-05
    %v170 = vadd.f32 %v166, 1e-05
    %v171 = vrsqrt.pop %v167
    %v172 = vmul.f32 %v171, %v167
    %v173 = vmul.f32 %v172, %v171
    %v174 = vmul.f32 0.5, %v173
    %v175 = vsub.f32 1.5, %v174
    %v176 = vmul.f32 %v171, %v175
    %vm177 = vweird.f32 %v167
    %vm178 = vweird.f32 %v171
    %vm179 = vmor %vm177, %vm178
    %v180 = vsel %vm179, %v171, %v176
    %v181 = vrsqrt.pop %v168
    %v182 = vmul.f32 %v181, %v168
    %v183 = vmul.f32 %v182, %v181
    %v184 = vmul.f32 0.5, %v183
    %v185 = vsub.f32 1.5, %v184
    %v186 = vmul.f32 %v181, %v185
    %vm187 = vweird.f32 %v168
    %vm188 = vweird.f32 %v181
    %vm189 = vmor %vm187, %vm188
    %v190 = vsel %vm189, %v181, %v186
    %v191 = vrsqrt.pop %v169
    %v192 = vmul.f32 %v191, %v169
    %v193 = vmul.f32 %v192, %v191
    %v194 = vmul.f32 0.5, %v193
    %v195 = vsub.f32 1.5, %v194
    %v196 = vmul.f32 %v191, %v195
    %vm197 = vweird.f32 %v169
    %vm198 = vweird.f32 %v191
    %vm199 = vmor %vm197, %vm198
    %v200 = vsel %vm199, %v191, %v196
    %v201 = vrsqrt.pop %v170
    %v202 = vmul.f32 %v201, %v170
    %v203 = vmul.f32 %v202, %v201
    %v204 = vmul.f32 0.5, %v203
    %v205 = vsub.f32 1.5, %v204
    %v206 = vmul.f32 %v201, %v205
    %vm207 = vweird.f32 %v170
    %vm208 = vweird.f32 %v201
    %vm209 = vmor %vm207, %vm208
    %v210 = vsel %vm209, %v201, %v206
    %v211 = vmul.f32 %v143, %v180
    %v212 = vmul.f32 %v144, %v190
    %v213 = vmul.f32 %v145, %v200
    %v214 = vmul.f32 %v146, %v210
    %v215 = vperm.slane %v78, 1
    %v216 = vmul.f32 %v211, %v215
    %v217 = vmul.f32 %v212, %v215
    %v218 = vmul.f32 %v213, %v215
    %v219 = vmul.f32 %v214, %v215
    %v220 = vperm.slane %v78, 2
    %v221 = vadd.f32 %v216, %v220
    %v222 = vadd.f32 %v217, %v220
    %v223 = vadd.f32 %v218, %v220
    %v224 = vadd.f32 %v219, %v220
    %225 = vst.msk [vmem:[%s4] sm:$0xff] %vm86, %v221
    %226 = vst.msk [vmem:[%s4 + $0x8] sm:$0xff] %vm86, %v222
    %227 = vst.msk [vmem:[%s4 + $0x10] sm:$0xff] %vm86, %v223
    %228 = vst.msk [vmem:[%s4 + $0x18] sm:$0xff] %vm86, %v224
    // Predicated region
    $region34: #{_forward.1} parent=1 // pred_check
      _
    $region35: #{_forward.1} parent=1 // pred_check_branch
      %230 = sbr.rel (0) target = $region37
    $region36: #{_forward.1} parent=1 // pred_region
      _
    $region37: #{_forward.1} parent=1 // pred_fallthru
      _
    // Predicated region
    $region38: #{_forward.1} parent=1 // pred_check
      _
    $region39: #{_forward.1} parent=1 // pred_check_branch
      %232 = sbr.rel (0) target = $region41
    $region40: #{_forward.1} parent=1 // pred_region
      _
    $region41: #{_forward.1} parent=1 // pred_fallthru
      _
    %233 = vsyncpa [#allocation3], 1
    %234 = vsyncpa [#allocation5], 1
    %235 = vsyncpa [#allocation8], 1

</llo_original>
